<compile_context>
chip_gen: v7x
topology: tpu7x:2x2x1
jax: 0.10.0
libtpu: 0.0.40
codegen_flags: <defaults>
</compile_context>

<pallas_src>
import jax
import jax.numpy as jnp
from jax.experimental import pallas as pl
from jax.experimental.pallas import tpu as pltpu

STATE_DIM = 4
ACTION_DIM = 2
HIDDEN = 64
STATE_PAD = 8      # input features padded to one full sublane group
OUT_PAD = 8        # output rows padded to one full sublane group (dense store)
LANE = 128
MAX_TILE_B = 1024  # batch lanes per grid step (multiple of 128); 512-1024 plateau


def _cdiv(a, b):
    return -(-a // b)


def _choose_tiling(batch):
    """Pick (tile_b, padded_b): tile is a multiple of 128 lanes, waste is small,
    and the grid has an even number of >=2 steps whenever the batch allows it
    (so both v7x TensorCores get work)."""
    n_gran = _cdiv(batch, LANE)                       # 128-row lane granules needed
    num_tiles = _cdiv(n_gran, MAX_TILE_B // LANE)
    if num_tiles == 1 and n_gran >= 2:
        num_tiles = 2                                 # enable megacore split on v7x
    elif num_tiles > 1 and num_tiles % 2:
        num_tiles += 1                                # even split across 2 TCs
    tb = _cdiv(n_gran, num_tiles) * LANE
    return tb, tb * num_tiles


def agent_kernel(xT_ref, w1_ref, b1_ref, w2_ref, b2_ref, w3_ref, b3_ref, o_ref):
    """One batch tile, transposed dataflow (batch along lanes).

    xT_ref: (8, tb)  f32 (rows 4..7 zero)     w1: (64, 8)  f32   b1: (64, 1) f32
    w2:     (64, 64) bf16                     b2: (64, 1)  f32
    w3:     (8, 64)  bf16 (rows 2..7 zero)    b3: (8, 1)   f32 (rows 2..7 zero)
    o_ref:  (8, tb)  f32 (rows 2..7 are tanh(0)=0, sliced off in the wrapper)
    """
    xT = xT_ref[...]                                                 # (8, tb) f32

    # Layer 1 on the (otherwise idle) MXU: (64, 8) @ (8, tb) -> (64, tb), f32.
    h1 = jnp.dot(w1_ref[...], xT, preferred_element_type=jnp.float32)
    h1 = jnp.maximum(h1 + b1_ref[...], 0.0)                          # bias bcast along lanes

    # Layer 2: bf16 MXU matmul, f32 accumulation; bias + ReLU in f32 on the VPU.
    h2 = jnp.dot(w2_ref[...], h1.astype(jnp.bfloat16),
                 preferred_element_type=jnp.float32)                 # (64, tb) f32
    h2 = jnp.maximum(h2 + b2_ref[...], 0.0)

    # Layer 3 (output rows padded 2 -> 8): bf16 MXU, f32 acc; bias + tanh (EUP) in f32.
    h3 = jnp.dot(w3_ref[...], h2.astype(jnp.bfloat16),
                 preferred_element_type=jnp.float32)                 # (8, tb) f32
    o_ref[...] = jnp.tanh(h3 + b3_ref[...])                          # dense (8, tb) store


def agent_forward(x, params):
    """x: (B, STATE_DIM) f32 -> (B, ACTION_DIM) f32."""
    w1, b1, w2, b2, w3, b3 = params
    B = x.shape[0]
    tb, b_pad = _choose_tiling(B)

    # Layout plumbing only: pad batch & features, put the batch on the lane axis.
    x_p = jnp.pad(x.astype(jnp.float32),
                  ((0, b_pad - B), (0, STATE_PAD - STATE_DIM)))
    xT = x_p.T                                                       # (8, b_pad)

    weight_bytes = sum(int(p.size) * p.dtype.itemsize for p in params)
    cost = pl.CostEstimate(
        flops=2 * b_pad * (STATE_PAD * HIDDEN + HIDDEN * HIDDEN + HIDDEN * OUT_PAD),
        transcendentals=b_pad * OUT_PAD,
        bytes_accessed=b_pad * (STATE_PAD + OUT_PAD) * 4 + weight_bytes,
    )

    resident = lambda i: (0, 0)  # weights/biases: same block every step -> stay in VMEM

    outT = pl.pallas_call(
        agent_kernel,
        out_shape=jax.ShapeDtypeStruct((OUT_PAD, b_pad), jnp.float32),
        grid_spec=pltpu.PrefetchScalarGridSpec(
            num_scalar_prefetch=0,
            grid=(b_pad // tb,),
            in_specs=[
                pl.BlockSpec((STATE_PAD, tb), lambda i: (0, i)),
                pl.BlockSpec((HIDDEN, STATE_PAD), resident),
                pl.BlockSpec((HIDDEN, 1), resident),
                pl.BlockSpec((HIDDEN, HIDDEN), resident),
                pl.BlockSpec((HIDDEN, 1), resident),
                pl.BlockSpec((OUT_PAD, HIDDEN), resident),
                pl.BlockSpec((OUT_PAD, 1), resident),
            ],
            out_specs=pl.BlockSpec((OUT_PAD, tb), lambda i: (0, i)),
        ),
        compiler_params=pltpu.CompilerParams(
            dimension_semantics=("parallel",),        # shard batch tiles across TCs (v7x)
            vmem_limit_bytes=32 * 1024 * 1024,        # explicit headroom (v5e default is 16 MiB)
        ),
        cost_estimate=cost,
    )(xT, w1, b1, w2, b2, w3, b3)

    return outT[:ACTION_DIM, :B].T                                   # (B, 2)


def init_params(key):
    """Deterministic init matching nn.Linear bounds.

    Weights kept in PyTorch's native (out, in) layout since the kernel computes
    y.T = W @ x.T; feature / output dims are zero-padded to sublane groups."""
    k1, k2, k3, k4, k5, k6 = jax.random.split(key, 6)

    def uniform(k, shape, fan_in, dtype=jnp.float32):
        bound = 1.0 / float(fan_in) ** 0.5
        return jax.random.uniform(k, shape, jnp.float32, -bound, bound).astype(dtype)

    w1 = jnp.pad(uniform(k1, (HIDDEN, STATE_DIM), STATE_DIM),
                 ((0, 0), (0, STATE_PAD - STATE_DIM)))                   # (64, 8) f32
    b1 = uniform(k2, (HIDDEN, 1), STATE_DIM)                             # (64, 1) f32
    w2 = uniform(k3, (HIDDEN, HIDDEN), HIDDEN, jnp.bfloat16)             # (64, 64) bf16
    b2 = uniform(k4, (HIDDEN, 1), HIDDEN)                                # (64, 1) f32
    w3 = jnp.pad(uniform(k5, (ACTION_DIM, HIDDEN), HIDDEN, jnp.bfloat16),
                 ((0, OUT_PAD - ACTION_DIM), (0, 0)))                    # (8, 64) bf16
    b3 = jnp.pad(uniform(k6, (ACTION_DIM, 1), HIDDEN),
                 ((0, OUT_PAD - ACTION_DIM), (0, 0)))                    # (8, 1) f32
    return (w1, b1, w2, b2, w3, b3)


def reference_forward(x, params):
    """Pure-JAX f32 reference (bf16 weights upcast); mirrors PyTorch forward."""
    w1, b1, w2, b2, w3, b3 = params
    h = jnp.maximum(x @ w1[:, :STATE_DIM].T + b1[:, 0], 0.0)
    h = jnp.maximum(h @ w2.astype(jnp.float32).T + b2[:, 0], 0.0)
    y = jnp.tanh(h @ w3.astype(jnp.float32).T + b3[:, 0])
    return y[:, :ACTION_DIM]


if __name__ == "__main__":
    key = jax.random.PRNGKey(0)
    pkey, xkey1, xkey2 = jax.random.split(key, 3)
    params = init_params(pkey)

    # Small shape implied by the module: batch=2, state_dim=4 (single-tile grid).
    x_small = jax.random.normal(xkey1, (2, STATE_DIM), dtype=jnp.float32)
    out_small = jax.block_until_ready(agent_forward(x_small, params))
    ref_small = reference_forward(x_small, params)
    assert out_small.shape == (2, ACTION_DIM)
    assert jnp.allclose(out_small, ref_small, atol=3e-2, rtol=3e-2)

    # Larger batch: exercises batch padding and the 2-step (megacore) grid.
    x_mid = jax.random.normal(xkey2, (300, STATE_DIM), dtype=jnp.float32)
    out_mid = jax.block_until_ready(agent_forward(x_mid, params))
    ref_mid = reference_forward(x_mid, params)
    assert out_mid.shape == (300, ACTION_DIM)
    assert jnp.allclose(out_mid, ref_mid, atol=3e-2, rtol=3e-2)

    print("KERNEL_OK")
</pallas_src>

<mosaic_0001>
module attributes {stable_mosaic.version = 11 : i64} {
  func.func @agent_kernel(%arg0: i32, %arg1: memref<8x128xf32, #tpu.memory_space<vmem>>, %arg2: memref<64x8xf32, #tpu.memory_space<vmem>>, %arg3: memref<64x1xf32, #tpu.memory_space<vmem>>, %arg4: memref<64x64xbf16, #tpu.memory_space<vmem>>, %arg5: memref<64x1xf32, #tpu.memory_space<vmem>>, %arg6: memref<8x64xbf16, #tpu.memory_space<vmem>>, %arg7: memref<8x1xf32, #tpu.memory_space<vmem>>, %arg8: memref<8x128xf32, #tpu.memory_space<vmem>>) attributes {dimension_semantics = [#tpu.dimension_semantics<parallel>], iteration_bounds = array<i64: 1>, scalar_prefetch = 0 : i64, scratch_operands = 0 : i64, tpu.core_type = #tpu.core_type<tc>, window_params = [{transform_indices = @transform_0, window_bounds = array<i64: 8, 128>}, {pipeline_mode = #tpu.pipeline_mode<synchronous>, transform_indices = @transform_1, window_bounds = array<i64: 64, 8>}, {pipeline_mode = #tpu.pipeline_mode<synchronous>, transform_indices = @transform_2, window_bounds = array<i64: 64, 1>}, {pipeline_mode = #tpu.pipeline_mode<synchronous>, transform_indices = @transform_3, window_bounds = array<i64: 64, 64>}, {pipeline_mode = #tpu.pipeline_mode<synchronous>, transform_indices = @transform_4, window_bounds = array<i64: 64, 1>}, {pipeline_mode = #tpu.pipeline_mode<synchronous>, transform_indices = @transform_5, window_bounds = array<i64: 8, 64>}, {pipeline_mode = #tpu.pipeline_mode<synchronous>, transform_indices = @transform_6, window_bounds = array<i64: 8, 1>}, {transform_indices = @transform_7, window_bounds = array<i64: 8, 128>}]} {
    %c0 = arith.constant 0 : index
    %c0_0 = arith.constant 0 : index
    %0 = vector.load %arg1[%c0, %c0_0] : memref<8x128xf32, #tpu.memory_space<vmem>>, vector<8x128xf32>
    %c0_1 = arith.constant 0 : index
    %c0_2 = arith.constant 0 : index
    %1 = vector.load %arg2[%c0_1, %c0_2] : memref<64x8xf32, #tpu.memory_space<vmem>>, vector<64x8xf32>
    %cst = arith.constant dense<0.000000e+00> : vector<64x128xf32>
    %2 = tpu.matmul %1, %0, %cst {dimension_numbers = #tpu.dot_dimension_numbers<[1], [0], [0], [1], [0, 0, 1, 1], [], []>} : vector<64x8xf32>, vector<8x128xf32>, vector<64x128xf32> -> vector<64x128xf32>
    %c0_3 = arith.constant 0 : index
    %c0_4 = arith.constant 0 : index
    %3 = vector.load %arg3[%c0_3, %c0_4] : memref<64x1xf32, #tpu.memory_space<vmem>>, vector<64x1xf32>
    %4 = vector.broadcast %3 : vector<64x1xf32> to vector<64x128xf32>
    %5 = arith.addf %2, %4 : vector<64x128xf32>
    %cst_5 = arith.constant 0.000000e+00 : f32
    %6 = vector.broadcast %cst_5 : f32 to vector<64x128xf32>
    %7 = arith.maximumf %5, %6 : vector<64x128xf32>
    %c0_6 = arith.constant 0 : index
    %c0_7 = arith.constant 0 : index
    %8 = vector.load %arg4[%c0_6, %c0_7] : memref<64x64xbf16, #tpu.memory_space<vmem>>, vector<64x64xbf16>
    %9 = arith.truncf %7 : vector<64x128xf32> to vector<64x128xbf16>
    %cst_8 = arith.constant dense<0.000000e+00> : vector<64x128xf32>
    %10 = tpu.matmul %8, %9, %cst_8 {dimension_numbers = #tpu.dot_dimension_numbers<[1], [0], [0], [1], [0, 0, 1, 1], [], []>} : vector<64x64xbf16>, vector<64x128xbf16>, vector<64x128xf32> -> vector<64x128xf32>
    %c0_9 = arith.constant 0 : index
    %c0_10 = arith.constant 0 : index
    %11 = vector.load %arg5[%c0_9, %c0_10] : memref<64x1xf32, #tpu.memory_space<vmem>>, vector<64x1xf32>
    %12 = vector.broadcast %11 : vector<64x1xf32> to vector<64x128xf32>
    %13 = arith.addf %10, %12 : vector<64x128xf32>
    %cst_11 = arith.constant 0.000000e+00 : f32
    %14 = vector.broadcast %cst_11 : f32 to vector<64x128xf32>
    %15 = arith.maximumf %13, %14 : vector<64x128xf32>
    %c0_12 = arith.constant 0 : index
    %c0_13 = arith.constant 0 : index
    %16 = vector.load %arg6[%c0_12, %c0_13] : memref<8x64xbf16, #tpu.memory_space<vmem>>, vector<8x64xbf16>
    %17 = arith.truncf %15 : vector<64x128xf32> to vector<64x128xbf16>
    %cst_14 = arith.constant dense<0.000000e+00> : vector<8x128xf32>
    %18 = tpu.matmul %16, %17, %cst_14 {dimension_numbers = #tpu.dot_dimension_numbers<[1], [0], [0], [1], [0, 0, 1, 1], [], []>} : vector<8x64xbf16>, vector<64x128xbf16>, vector<8x128xf32> -> vector<8x128xf32>
    %c0_15 = arith.constant 0 : index
    %c0_16 = arith.constant 0 : index
    %19 = vector.load %arg7[%c0_15, %c0_16] : memref<8x1xf32, #tpu.memory_space<vmem>>, vector<8x1xf32>
    %20 = vector.broadcast %19 : vector<8x1xf32> to vector<8x128xf32>
    %21 = arith.addf %18, %20 : vector<8x128xf32>
    %22 = math.tanh %21 : vector<8x128xf32>
    %c0_17 = arith.constant 0 : index
    %c0_18 = arith.constant 0 : index
    %23 = vector.load %arg8[%c0_17, %c0_18] : memref<8x128xf32, #tpu.memory_space<vmem>>, vector<8x128xf32>
    tpu.vector_store %arg8[%c0_17, %c0_18], %22 {strides = array<i32>} : memref<8x128xf32, #tpu.memory_space<vmem>>, vector<8x128xf32>,
    return
  }
  func.func @transform_0(%arg0: i32) -> (i32, i32) {
    %c0_i32 = arith.constant 0 : i32
    %c0_i32_0 = arith.constant 0 : i32
    return %c0_i32, %arg0 : i32, i32
  }
  func.func @transform_1(%arg0: i32) -> (i32, i32) {
    %c0_i32 = arith.constant 0 : i32
    %c0_i32_0 = arith.constant 0 : i32
    %c0_i32_1 = arith.constant 0 : i32
    return %c0_i32, %c0_i32_0 : i32, i32
  }
  func.func @transform_2(%arg0: i32) -> (i32, i32) {
    %c0_i32 = arith.constant 0 : i32
    %c0_i32_0 = arith.constant 0 : i32
    %c0_i32_1 = arith.constant 0 : i32
    return %c0_i32, %c0_i32_0 : i32, i32
  }
  func.func @transform_3(%arg0: i32) -> (i32, i32) {
    %c0_i32 = arith.constant 0 : i32
    %c0_i32_0 = arith.constant 0 : i32
    %c0_i32_1 = arith.constant 0 : i32
    return %c0_i32, %c0_i32_0 : i32, i32
  }
  func.func @transform_4(%arg0: i32) -> (i32, i32) {
    %c0_i32 = arith.constant 0 : i32
    %c0_i32_0 = arith.constant 0 : i32
    %c0_i32_1 = arith.constant 0 : i32
    return %c0_i32, %c0_i32_0 : i32, i32
  }
  func.func @transform_5(%arg0: i32) -> (i32, i32) {
    %c0_i32 = arith.constant 0 : i32
    %c0_i32_0 = arith.constant 0 : i32
    %c0_i32_1 = arith.constant 0 : i32
    return %c0_i32, %c0_i32_0 : i32, i32
  }
  func.func @transform_6(%arg0: i32) -> (i32, i32) {
    %c0_i32 = arith.constant 0 : i32
    %c0_i32_0 = arith.constant 0 : i32
    %c0_i32_1 = arith.constant 0 : i32
    return %c0_i32, %c0_i32_0 : i32, i32
  }
  func.func @transform_7(%arg0: i32) -> (i32, i32) {
    %c0_i32 = arith.constant 0 : i32
    %c0_i32_0 = arith.constant 0 : i32
    return %c0_i32, %arg0 : i32, i32
  }
}

</mosaic_0001>

<llo_original>
// kernel: tpu_custom_call.1
$region0: #{tpu_custom_call.1}
  #allocation0 [shape = 'u32[]', space=smem, size = 0x4, offset = 0x4, fixed_abs, tag = 'smem constant byte address 0x4 - core index']
  #allocation1 [shape = 'u32[144,128]{1,0:T(1,128)}', space=vmem, size = 0x12000, scoped, tag = 'internal scratch']
  %s0 = inlined_call_operand.vmem [shape: f32[8,128], index: 0, kind: input, shape index: {}]
  %s1 = inlined_call_operand.vmem [shape: f32[64,8], index: 1, kind: input, shape index: {}]
  %s2 = inlined_call_operand.vmem [shape: f32[64,1], index: 2, kind: input, shape index: {}]
  %s3 = inlined_call_operand.vmem [shape: bf16[64,64], index: 3, kind: input, shape index: {}]
  %s4 = inlined_call_operand.vmem [shape: f32[64,1], index: 4, kind: input, shape index: {}]
  %s5 = inlined_call_operand.vmem [shape: bf16[8,64], index: 5, kind: input, shape index: {}]
  %s6 = inlined_call_operand.vmem [shape: f32[8,1], index: 6, kind: input, shape index: {}]
  %s7 = inlined_call_operand.hbm [shape: f32[8,128], index: 7, kind: output, shape index: {}]
  %s8 = sld [smem:[#allocation0]]
  $region38: #{tpu_custom_call.1} parent=0
    _
  %s10 = ssub.s32 1, %s8
  %s11 = scalar_select 0, %s10, %s8
  $region1: #{tpu_custom_call.1} parent=0
    #allocation2 [shape = 'u8[4096]{0}', space=vmem, size = 0x1000, scoped, tag = 'output window, operand 0, single buffered']
    #allocation3 [shape = 's32[1]{0}', space=sflag, size = 0x4, scoped, tag = 'scoped memory for tpu_custom_call.1']
    %12 = vsyncpa [#allocation3], 0
    // Predicated region
    $region2: #{tpu_custom_call.1} parent=1 // pred_check
      _
    $region3: #{tpu_custom_call.1} parent=1 // pred_check_branch
      %14 = sbr.rel (0) target = $region5
    $region4: #{tpu_custom_call.1} parent=1 // pred_region
      _
    $region5: #{tpu_custom_call.1} parent=1 // pred_fallthru
      _
    // Predicated region
    $region6: #{tpu_custom_call.1} parent=1 // pred_check
      _
    $region7: #{tpu_custom_call.1} parent=1 // pred_check_branch
      %16 = sbr.rel (0) target = $region9
    $region8: #{tpu_custom_call.1} parent=1 // pred_region
      _
    $region9: #{tpu_custom_call.1} parent=1 // pred_fallthru
      _
    // Predicated region
    $region10: #{tpu_custom_call.1} parent=1 // pred_check
      _
    $region11: #{tpu_custom_call.1} parent=1 // pred_check_branch
      %18 = sbr.rel (0) target = $region13
    $region12: #{tpu_custom_call.1} parent=1 // pred_region
      _
    $region13: #{tpu_custom_call.1} parent=1 // pred_fallthru
      _
    // Predicated region
    $region14: #{tpu_custom_call.1} parent=1 // pred_check
      _
    $region15: #{tpu_custom_call.1} parent=1 // pred_check_branch
      %20 = sbr.rel (0) target = $region17
    $region16: #{tpu_custom_call.1} parent=1 // pred_region
      _
    $region17: #{tpu_custom_call.1} parent=1 // pred_fallthru
      _
    // Predicated region
    $region18: #{tpu_custom_call.1} parent=1 // pred_check
      _
    $region19: #{tpu_custom_call.1} parent=1 // pred_check_branch
      %22 = sbr.rel (0) target = $region21
    $region20: #{tpu_custom_call.1} parent=1 // pred_region
      _
    $region21: #{tpu_custom_call.1} parent=1 // pred_fallthru
      _
    // Predicated region
    $region22: #{tpu_custom_call.1} parent=1 // pred_check
      _
    $region23: #{tpu_custom_call.1} parent=1 // pred_check_branch
      %24 = sbr.rel (0) target = $region25
    $region24: #{tpu_custom_call.1} parent=1 // pred_region
      _
    $region25: #{tpu_custom_call.1} parent=1 // pred_fallthru
      _
    // Predicated region
    $region26: #{tpu_custom_call.1} parent=1 // pred_check
      _
    $region27: #{tpu_custom_call.1} parent=1 // pred_check_branch
      %26 = sbr.rel (0) target = $region29
    $region28: #{tpu_custom_call.1} parent=1 // pred_region
      _
    $region29: #{tpu_custom_call.1} parent=1 // pred_fallthru
      _
    %v28 = vld [vmem:[%s0] sm:$0xff]
    %v29 = vld [vmem:[%s1] sm:$0xff]
    %v30 = vld [vmem:[%s1 + $0x8] sm:$0xff]
    %v31 = vld [vmem:[%s1 + $0x10] sm:$0xff]
    %v32 = vld [vmem:[%s1 + $0x18] sm:$0xff]
    %v33 = vld [vmem:[%s1 + $0x20] sm:$0xff]
    %v34 = vld [vmem:[%s1 + $0x28] sm:$0xff]
    %v35 = vld [vmem:[%s1 + $0x30] sm:$0xff]
    %v36 = vld [vmem:[%s1 + $0x38] sm:$0xff]
    %v37 = vld [vmem:[%s2] sm:$0xff]
    %v38 = vld [vmem:[%s2 + $0x8] sm:$0xff]
    %v39 = vld [vmem:[%s2 + $0x10] sm:$0xff]
    %v40 = vld [vmem:[%s2 + $0x18] sm:$0xff]
    %v41 = vld [vmem:[%s2 + $0x20] sm:$0xff]
    %v42 = vld [vmem:[%s2 + $0x28] sm:$0xff]
    %v43 = vld [vmem:[%s2 + $0x30] sm:$0xff]
    %v44 = vld [vmem:[%s2 + $0x38] sm:$0xff]
    %46 = vset.pattern.permute.xlu0 0
    %47 = vperm.xlu0 %46, %v37
    %v48 = vpop.permute.xlu0 %47
    %51 = vset.pattern.permute.xlu0 0
    %52 = vperm.xlu0 %51, %v38
    %v53 = vpop.permute.xlu0 %52
    %56 = vset.pattern.permute.xlu0 0
    %57 = vperm.xlu0 %56, %v39
    %v58 = vpop.permute.xlu0 %57
    %61 = vset.pattern.permute.xlu0 0
    %62 = vperm.xlu0 %61, %v40
    %v63 = vpop.permute.xlu0 %62
    %66 = vset.pattern.permute.xlu0 0
    %67 = vperm.xlu0 %66, %v41
    %v68 = vpop.permute.xlu0 %67
    %71 = vset.pattern.permute.xlu0 0
    %72 = vperm.xlu0 %71, %v42
    %v73 = vpop.permute.xlu0 %72
    %76 = vset.pattern.permute.xlu0 0
    %77 = vperm.xlu0 %76, %v43
    %v78 = vpop.permute.xlu0 %77
    %81 = vset.pattern.permute.xlu0 0
    %82 = vperm.xlu0 %81, %v44
    %v83 = vpop.permute.xlu0 %82
    %vm85 = vcmask 64512
    %v87 = vsel %vm85, %v29, 0
    %v90 = vsel %vm85, %v30, 0
    %v93 = vsel %vm85, %v31, 0
    %v96 = vsel %vm85, %v32, 0
    %v99 = vsel %vm85, %v33, 0
    %v102 = vsel %vm85, %v34, 0
    %v105 = vsel %vm85, %v35, 0
    %v108 = vsel %vm85, %v36, 0
    %110 = vmatprep.subr.mxu0 0.0
    %111 = vmatpush1.msra.mxu0 %v28
    %112 = vmatprep.subr.mxu0 0.0
    %113 = vmatpush1.msra.mxu0 0.0
    %114 = vmatprep.subr.mxu0 0.0
    %115 = vmatpush1.msra.mxu0 0.0
    %116 = vmatprep.subr.mxu0 0.0
    %117 = vmatpush1.msra.mxu0 0.0
    %118 = vmatprep.subr.mxu0 0.0
    %119 = vmatpush1.msra.mxu0 0.0
    %120 = vmatprep.subr.mxu0 0.0
    %121 = vmatpush1.msra.mxu0 0.0
    %122 = vmatprep.subr.mxu0 0.0
    %123 = vmatpush1.msra.mxu0 0.0
    %124 = vmatprep.subr.mxu0 0.0
    %125 = vmatpush1.msra.mxu0 0.0
    %126 = vmatprep.subr.mxu0 0.0
    %127 = vmatpush1.msra.mxu0 0.0
    %128 = vmatprep.subr.mxu0 0.0
    %129 = vmatpush1.msra.mxu0 0.0
    %130 = vmatprep.subr.mxu0 0.0
    %131 = vmatpush1.msra.mxu0 0.0
    %132 = vmatprep.subr.mxu0 0.0
    %133 = vmatpush1.msra.mxu0 0.0
    %134 = vmatprep.subr.mxu0 0.0
    %135 = vmatpush1.msra.mxu0 0.0
    %136 = vmatprep.subr.mxu0 0.0
    %137 = vmatpush1.msra.mxu0 0.0
    %138 = vmatprep.subr.mxu0 0.0
    %139 = vmatpush1.msra.mxu0 0.0
    %140 = vmatprep.subr.mxu0 0.0
    %141 = vmatpush1.msra.mxu0 0.0
    %142 = vmatprep.subr.mxu0 0.0
    %143 = vmatpush1.msra.mxu0 0.0
    %144 = vmatprep.subr.mxu0 0.0
    %145 = vmatpush1.msra.mxu0 0.0
    %146 = vmatprep.subr.mxu0 0.0
    %147 = vmatpush1.msra.mxu0 0.0
    %148 = vmatprep.subr.mxu0 0.0
    %149 = vmatpush1.msra.mxu0 0.0
    %150 = vmatprep.subr.mxu0 0.0
    %151 = vmatpush1.msra.mxu0 0.0
    %152 = vmatprep.subr.mxu0 0.0
    %153 = vmatpush1.msra.mxu0 0.0
    %154 = vmatprep.subr.mxu0 0.0
    %155 = vmatpush1.msra.mxu0 0.0
    %156 = vmatprep.subr.mxu0 0.0
    %157 = vmatpush1.msra.mxu0 0.0
    %158 = vmatprep.subr.mxu0 0.0
    %159 = vmatpush1.msra.mxu0 0.0
    %160 = vmatprep.subr.mxu0 0.0
    %161 = vmatpush1.msra.mxu0 0.0
    %162 = vmatprep.subr.mxu0 0.0
    %163 = vmatpush1.msra.mxu0 0.0
    %164 = vmatprep.subr.mxu0 0.0
    %165 = vmatpush1.msra.mxu0 0.0
    %166 = vmatprep.subr.mxu0 0.0
    %167 = vmatpush1.msra.mxu0 0.0
    %168 = vmatprep.subr.mxu0 0.0
    %169 = vmatpush1.msra.mxu0 0.0
    %170 = vmatprep.subr.mxu0 0.0
    %171 = vmatpush1.msra.mxu0 0.0
    %172 = vmatprep.subr.mxu0 0.0
    %173 = vmatpush1.msra.mxu0 0.0
    %174 = vmatprep.mubr.f32.mxu0 0.0
    %175 = vmatmul.mubr.f32.gmra.mrb[0].mxu0 %v87
    %v176 = vpop.f32.mrb[0].mxu0
    %v177 = vadd.f32 %v48, %v176
    %v178 = vpop.f32.mrb[0].mxu0
    %179 = vmatprep.mubr.f32.mxu0 0.0
    %180 = vmatmul.mubr.f32.gmra.mrb[0].mxu0 %v90
    %v181 = vpop.f32.mrb[0].mxu0
    %v182 = vadd.f32 %v53, %v181
    %v183 = vpop.f32.mrb[0].mxu0
    %184 = vmatprep.mubr.f32.mxu0 0.0
    %185 = vmatmul.mubr.f32.gmra.mrb[0].mxu0 %v93
    %v186 = vpop.f32.mrb[0].mxu0
    %v187 = vadd.f32 %v58, %v186
    %v188 = vpop.f32.mrb[0].mxu0
    %189 = vmatprep.mubr.f32.mxu0 0.0
    %190 = vmatmul.mubr.f32.gmra.mrb[0].mxu0 %v96
    %v191 = vpop.f32.mrb[0].mxu0
    %v192 = vadd.f32 %v63, %v191
    %v193 = vpop.f32.mrb[0].mxu0
    %194 = vmatprep.mubr.f32.mxu0 0.0
    %195 = vmatmul.mubr.f32.gmra.mrb[0].mxu0 %v99
    %v196 = vpop.f32.mrb[0].mxu0
    %v197 = vadd.f32 %v68, %v196
    %v198 = vpop.f32.mrb[0].mxu0
    %199 = vmatprep.mubr.f32.mxu0 0.0
    %200 = vmatmul.mubr.f32.gmra.mrb[0].mxu0 %v102
    %v201 = vpop.f32.mrb[0].mxu0
    %v202 = vadd.f32 %v73, %v201
    %v203 = vpop.f32.mrb[0].mxu0
    %204 = vmatprep.mubr.f32.mxu0 0.0
    %205 = vmatmul.mubr.f32.gmra.mrb[0].mxu0 %v105
    %v206 = vpop.f32.mrb[0].mxu0
    %v207 = vadd.f32 %v78, %v206
    %v208 = vpop.f32.mrb[0].mxu0
    %209 = vmatprep.mubr.f32.mxu0 0.0
    %210 = vmatmul.mubr.f32.gmra.mrb[0].mxu0 %v108
    %v211 = vpop.f32.mrb[0].mxu0
    %v212 = vadd.f32 %v83, %v211
    %v213 = vpop.f32.mrb[0].mxu0
    %214 = vdwg.mxu0
    %v215 = vmax.f32 %v177, 0.0
    %v216 = vmax.f32 %v182, 0.0
    %v217 = vmax.f32 %v187, 0.0
    %v218 = vmax.f32 %v192, 0.0
    %v219 = vmax.f32 %v197, 0.0
    %v220 = vmax.f32 %v202, 0.0
    %v221 = vmax.f32 %v207, 0.0
    %v222 = vmax.f32 %v212, 0.0
    %v223 = vld [vmem:[%s3] sm:$0xf]
    %v224 = vld [vmem:[%s3 + $0x4] sm:$0xf]
    %v225 = vld [vmem:[%s3 + $0x8] sm:$0xf]
    %v226 = vld [vmem:[%s3 + $0xc] sm:$0xf]
    %v227 = vld [vmem:[%s3 + $0x10] sm:$0xf]
    %v228 = vld [vmem:[%s3 + $0x14] sm:$0xf]
    %v229 = vld [vmem:[%s3 + $0x18] sm:$0xf]
    %v230 = vld [vmem:[%s3 + $0x1c] sm:$0xf]
    %v231 = vpack.c.bf16 %v216, %v215
    %v232 = vpack.c.bf16 %v218, %v217
    %v233 = vpack.c.bf16 %v220, %v219
    %v234 = vpack.c.bf16 %v222, %v221
    %v235 = vld [vmem:[%s4] sm:$0xff]
    %v236 = vld [vmem:[%s4 + $0x8] sm:$0xff]
    %v237 = vld [vmem:[%s4 + $0x10] sm:$0xff]
    %v238 = vld [vmem:[%s4 + $0x18] sm:$0xff]
    %v239 = vld [vmem:[%s4 + $0x20] sm:$0xff]
    %v240 = vld [vmem:[%s4 + $0x28] sm:$0xff]
    %v241 = vld [vmem:[%s4 + $0x30] sm:$0xff]
    %v242 = vld [vmem:[%s4 + $0x38] sm:$0xff]
    %244 = vset.pattern.permute.xlu0 0
    %245 = vperm.xlu0 %244, %v235
    %v246 = vpop.permute.xlu0 %245
    %249 = vset.pattern.permute.xlu0 0
    %250 = vperm.xlu0 %249, %v236
    %v251 = vpop.permute.xlu0 %250
    %254 = vset.pattern.permute.xlu0 0
    %255 = vperm.xlu0 %254, %v237
    %v256 = vpop.permute.xlu0 %255
    %259 = vset.pattern.permute.xlu0 0
    %260 = vperm.xlu0 %259, %v238
    %v261 = vpop.permute.xlu0 %260
    %264 = vset.pattern.permute.xlu0 0
    %265 = vperm.xlu0 %264, %v239
    %v266 = vpop.permute.xlu0 %265
    %269 = vset.pattern.permute.xlu0 0
    %270 = vperm.xlu0 %269, %v240
    %v271 = vpop.permute.xlu0 %270
    %274 = vset.pattern.permute.xlu0 0
    %275 = vperm.xlu0 %274, %v241
    %v276 = vpop.permute.xlu0 %275
    %279 = vset.pattern.permute.xlu0 0
    %280 = vperm.xlu0 %279, %v242
    %v281 = vpop.permute.xlu0 %280
    %v291 = vunpack.c.l.b16 %v223
    %v292 = vunpack.c.l.b16 %v224
    %v293 = vunpack.c.l.b16 %v225
    %v294 = vunpack.c.l.b16 %v226
    %v295 = vunpack.c.l.b16 %v227
    %v296 = vunpack.c.l.b16 %v228
    %v297 = vunpack.c.l.b16 %v229
    %v298 = vunpack.c.l.b16 %v230
    %v299 = vpack.c.b16 %v292, %v291
    %v300 = vpack.c.b16 %v294, %v293
    %v301 = vpack.c.b16 %v296, %v295
    %v302 = vpack.c.b16 %v298, %v297
    %vm303 = vcmask 523264
    %v305 = vsel %vm303, %v299, 0
    %v308 = vsel %vm303, %v300, 0
    %v311 = vsel %vm303, %v301, 0
    %v314 = vsel %vm303, %v302, 0
    %316 = vmatprep.subr.bf16.mxu0 0
    %317 = vmatpush1.bf16.msra.mxu0 %v231
    %318 = vmatprep.subr.bf16.mxu0 0
    %319 = vmatpush1.bf16.msra.mxu0 %v232
    %320 = vmatprep.subr.bf16.mxu0 0
    %321 = vmatpush1.bf16.msra.mxu0 %v233
    %322 = vmatprep.subr.bf16.mxu0 0
    %323 = vmatpush1.bf16.msra.mxu0 %v234
    %324 = vmatprep.subr.bf16.mxu0 0
    %325 = vmatpush1.bf16.msra.mxu0 0
    %326 = vmatprep.subr.bf16.mxu0 0
    %327 = vmatpush1.bf16.msra.mxu0 0
    %328 = vmatprep.subr.bf16.mxu0 0
    %329 = vmatpush1.bf16.msra.mxu0 0
    %330 = vmatprep.subr.bf16.mxu0 0
    %331 = vmatpush1.bf16.msra.mxu0 0
    %332 = vmatprep.subr.bf16.mxu0 0
    %333 = vmatpush1.bf16.msra.mxu0 0
    %334 = vmatprep.subr.bf16.mxu0 0
    %335 = vmatpush1.bf16.msra.mxu0 0
    %336 = vmatprep.subr.bf16.mxu0 0
    %337 = vmatpush1.bf16.msra.mxu0 0
    %338 = vmatprep.subr.bf16.mxu0 0
    %339 = vmatpush1.bf16.msra.mxu0 0
    %340 = vmatprep.subr.bf16.mxu0 0
    %341 = vmatpush1.bf16.msra.mxu0 0
    %342 = vmatprep.subr.bf16.mxu0 0
    %343 = vmatpush1.bf16.msra.mxu0 0
    %344 = vmatprep.subr.bf16.mxu0 0
    %345 = vmatpush1.bf16.msra.mxu0 0
    %346 = vmatprep.subr.bf16.mxu0 0
    %347 = vmatpush1.bf16.msra.mxu0 0
    %348 = vmatprep.mubr.bf16.mxu0 0
    %349 = vmatmul.mubr.bf16.gmra.mrb[0].mxu0 %v305
    %v350 = vpop.f32.mrb[0].mxu0
    %v351 = vadd.f32 %v246, %v350
    %v352 = vpop.f32.mrb[0].mxu0
    %v353 = vpop.f32.mrb[0].mxu0
    %v354 = vadd.f32 %v251, %v353
    %v355 = vpop.f32.mrb[0].mxu0
    %356 = vmatprep.mubr.bf16.mxu0 0
    %357 = vmatmul.mubr.bf16.gmra.mrb[0].mxu0 %v308
    %v358 = vpop.f32.mrb[0].mxu0
    %v359 = vadd.f32 %v256, %v358
    %v360 = vpop.f32.mrb[0].mxu0
    %v361 = vpop.f32.mrb[0].mxu0
    %v362 = vadd.f32 %v261, %v361
    %v363 = vpop.f32.mrb[0].mxu0
    %364 = vmatprep.mubr.bf16.mxu0 0
    %365 = vmatmul.mubr.bf16.gmra.mrb[0].mxu0 %v311
    %v366 = vpop.f32.mrb[0].mxu0
    %v367 = vadd.f32 %v266, %v366
    %v368 = vpop.f32.mrb[0].mxu0
    %v369 = vpop.f32.mrb[0].mxu0
    %v370 = vadd.f32 %v271, %v369
    %v371 = vpop.f32.mrb[0].mxu0
    %372 = vmatprep.mubr.bf16.mxu0 0
    %373 = vmatmul.mubr.bf16.gmra.mrb[0].mxu0 %v314
    %v374 = vpop.f32.mrb[0].mxu0
    %v375 = vadd.f32 %v276, %v374
    %v376 = vpop.f32.mrb[0].mxu0
    %v377 = vpop.f32.mrb[0].mxu0
    %v378 = vadd.f32 %v281, %v377
    %v379 = vpop.f32.mrb[0].mxu0
    %380 = vdwg.mxu0
    %v381 = vmax.f32 %v351, 0.0
    %v382 = vmax.f32 %v354, 0.0
    %v383 = vmax.f32 %v359, 0.0
    %v384 = vmax.f32 %v362, 0.0
    %v385 = vmax.f32 %v367, 0.0
    %v386 = vmax.f32 %v370, 0.0
    %v387 = vmax.f32 %v375, 0.0
    %v388 = vmax.f32 %v378, 0.0
    %v389 = vld [vmem:[%s5] sm:$0xf]
    %v390 = vpack.c.bf16 %v382, %v381
    %v391 = vpack.c.bf16 %v384, %v383
    %v392 = vpack.c.bf16 %v386, %v385
    %v393 = vpack.c.bf16 %v388, %v387
    %v394 = vld [vmem:[%s6] sm:$0xff]
    %396 = vset.pattern.permute.xlu0 0
    %397 = vperm.xlu0 %396, %v394
    %v398 = vpop.permute.xlu0 %397
    %v401 = vsel %vm303, %v389, 0
    %403 = vmatprep.subr.bf16.mxu0 0
    %404 = vmatpush1.bf16.msra.mxu0 %v390
    %405 = vmatprep.subr.bf16.mxu0 0
    %406 = vmatpush1.bf16.msra.mxu0 %v391
    %407 = vmatprep.subr.bf16.mxu0 0
    %408 = vmatpush1.bf16.msra.mxu0 %v392
    %409 = vmatprep.subr.bf16.mxu0 0
    %410 = vmatpush1.bf16.msra.mxu0 %v393
    %411 = vmatprep.subr.bf16.mxu0 0
    %412 = vmatpush1.bf16.msra.mxu0 0
    %413 = vmatprep.subr.bf16.mxu0 0
    %414 = vmatpush1.bf16.msra.mxu0 0
    %415 = vmatprep.subr.bf16.mxu0 0
    %416 = vmatpush1.bf16.msra.mxu0 0
    %417 = vmatprep.subr.bf16.mxu0 0
    %418 = vmatpush1.bf16.msra.mxu0 0
    %419 = vmatprep.subr.bf16.mxu0 0
    %420 = vmatpush1.bf16.msra.mxu0 0
    %421 = vmatprep.subr.bf16.mxu0 0
    %422 = vmatpush1.bf16.msra.mxu0 0
    %423 = vmatprep.subr.bf16.mxu0 0
    %424 = vmatpush1.bf16.msra.mxu0 0
    %425 = vmatprep.subr.bf16.mxu0 0
    %426 = vmatpush1.bf16.msra.mxu0 0
    %427 = vmatprep.subr.bf16.mxu0 0
    %428 = vmatpush1.bf16.msra.mxu0 0
    %429 = vmatprep.subr.bf16.mxu0 0
    %430 = vmatpush1.bf16.msra.mxu0 0
    %431 = vmatprep.subr.bf16.mxu0 0
    %432 = vmatpush1.bf16.msra.mxu0 0
    %433 = vmatprep.subr.bf16.mxu0 0
    %434 = vmatpush1.bf16.msra.mxu0 0
    %435 = vmatprep.mubr.bf16.mxu0 0
    %436 = vmatmul.mubr.bf16.gmra.mrb[0].mxu0 %v401
    %v437 = vpop.f32.mrb[0].mxu0
    %v438 = vadd.f32 %v398, %v437
    %v439 = vpop.f32.mrb[0].mxu0
    %v440 = vpop.f32.mrb[0].mxu0
    %v441 = vpop.f32.mrb[0].mxu0
    %442 = vdwg.mxu0
    %v443 = vtanh.pop %v438
    %444 = vst [vmem:[#allocation2] sm:$0xff] %v443
    // Predicated region
    $region30: #{tpu_custom_call.1} parent=1 // pred_check
      _
    $region31: #{tpu_custom_call.1} parent=1 // pred_check_branch
      %446 = sbr.rel (0) target = $region33
    $region32: #{tpu_custom_call.1} parent=1 // pred_region
      %s448 = ssub.s32 128, 128
      %449 = vsyncadd [#allocation3], %s448
      %s451 = sshll.u32 [#allocation2], 4
      %s452 = int_to_ptr.vmem [resolvable:$true] %s451
      %454 = dma.vmem_to_hbm [thread:$0]  %s452, 128, %s7, [#allocation3]
    $region33: #{tpu_custom_call.1} parent=1 // pred_fallthru
      _
    // Predicated region
    $region34: #{tpu_custom_call.1} parent=1 // pred_check
      _
    $region35: #{tpu_custom_call.1} parent=1 // pred_check_branch
      %456 = sbr.rel (0) target = $region37
    $region36: #{tpu_custom_call.1} parent=1 // pred_region
      %457 = dma.done [#allocation3], 128
    $region37: #{tpu_custom_call.1} parent=1 // pred_fallthru
      _
    %458 = vsyncpa [#allocation3], 1

</llo_original>
